<compile_context>
chip_gen: v5e
topology: v5e:2x2
jax: 0.10.0
libtpu: 0.0.40
codegen_flags: <defaults>
</compile_context>

<pallas_src>
import functools

import jax
import jax.numpy as jnp
from jax import lax
from jax.experimental import pallas as pl
from jax.experimental.pallas import tpu as pltpu


def _cdiv(a, b):
    return -(-a // b)


def _round_up(a, b):
    return _cdiv(a, b) * b


# -----------------------------------------------------------------------------
# Fused MLP kernel (batch on lanes), inner 512-lane chunk loop.
# -----------------------------------------------------------------------------
def _laplace_pinn_kernel(x_ref,
                         w1_ref, b1_ref,
                         w2_ref, b2_ref,
                         w3_ref, b3_ref,
                         w4c_ref, b4_ref,
                         o_ref, *, chunk, n_chunks):
    # Hoist the (tiny, resident) weights out of the chunk loop.
    w1 = w1_ref[...]            # (30, 2)
    b1 = b1_ref[...]            # (30, 1)
    w2 = w2_ref[...]            # (30, 30)
    b2 = b2_ref[...]            # (30, 1)
    w3 = w3_ref[...]            # (30, 30)
    b3 = b3_ref[...]            # (30, 1)
    w4c = w4c_ref[...]          # (30, 1)  (pre-transposed layer-4 weight)
    b4 = b4_ref[...]            # (1, 1)

    def body(c, carry):
        off = pl.multiple_of(c * chunk, chunk)
        x = x_ref[:, pl.ds(off, chunk)]                       # (2, chunk)

        # Layer 1: contraction depth is only 2 -> two VPU broadcast FMAs
        # are cheaper than pushing a K=2 matmul through the MXU.
        h = jnp.tanh(w1[:, 0:1] * x[0:1, :]
                     + w1[:, 1:2] * x[1:2, :] + b1)           # (30, chunk)

        # Layers 2/3: 30x30 MXU matmuls, batch dense on the lanes.
        h = jnp.tanh(jnp.dot(w2, h,
                             preferred_element_type=jnp.float32) + b2)
        h = jnp.tanh(jnp.dot(w3, h,
                             preferred_element_type=jnp.float32) + b3)

        # Layer 4: single output row -> VPU broadcast mul + XLU sublane
        # reduce (overlaps with layer-3 epilogue; skips an MXU push/pop).
        y = jnp.sum(w4c * h, axis=0, keepdims=True) + b4      # (1, chunk)

        o_ref[:, pl.ds(off, chunk)] = y.astype(o_ref.dtype)
        return carry

    lax.fori_loop(0, n_chunks, body, 0, unroll=True)


# -----------------------------------------------------------------------------
# Primary (lanes-major) entry point: x_t is (2, N), result is (1, N).
# No pad, no transpose, no output slice: Pallas masks the partial last block.
# -----------------------------------------------------------------------------
@functools.partial(jax.jit, static_argnames=("block_n", "chunk"))
def laplace_pinn_forward_t(x_t, params, block_n=None, chunk=512):
    assert x_t.ndim == 2 and x_t.shape[0] == 2, "x_t must be (2, N) lanes-major"
    assert chunk % 128 == 0, "chunk must be a multiple of the 128-lane width"
    N = x_t.shape[1]
    w1, b1, w2, b2, w3, b3, w4, b4 = params

    if block_n is None:
        # Big enough to amortize ~0.35 us/grid-step overhead, small enough
        # that v7x's two TensorCores both get grid steps for realistic N.
        block_n = min(4096, max(chunk, _round_up(_cdiv(N, 2), chunk)))
    assert block_n % chunk == 0
    n_chunks = block_n // chunk
    grid = (_cdiv(N, block_n),)

    x_t = x_t.astype(jnp.float32)
    w4c = w4.T                                   # (30, 1) column for VPU layer 4

    def resident(shape):
        # Single full-array block, same block index every grid step ->
        # weights stay resident in VMEM across the whole grid.
        return pl.BlockSpec(shape, lambda i: (0, 0))

    in_specs = [
        pl.BlockSpec((2, block_n), lambda i: (0, i)),   # x tile (features, rows)
        resident(w1.shape), resident(b1.shape),
        resident(w2.shape), resident(b2.shape),
        resident(w3.shape), resident(b3.shape),
        resident(w4c.shape), resident(b4.shape),
    ]
    out_specs = pl.BlockSpec((1, block_n), lambda i: (0, i))

    weight_bytes = sum(int(p.size) * 4 for p in params)
    cost = pl.CostEstimate(
        # per row: 2*2*30 + 2*30*30 + 2*30*30 + 2*30 flops, 3*30 tanh
        flops=int(N) * (2 * 2 * 30 + 2 * 30 * 30 + 2 * 30 * 30 + 2 * 30),
        transcendentals=int(N) * 3 * 30,
        bytes_accessed=int(N) * (2 + 1) * 4 + weight_bytes,
    )

    kernel = functools.partial(_laplace_pinn_kernel,
                               chunk=chunk, n_chunks=n_chunks)

    return pl.pallas_call(
        kernel,
        out_shape=jax.ShapeDtypeStruct((1, N), jnp.float32),
        grid_spec=pltpu.PrefetchScalarGridSpec(
            num_scalar_prefetch=0,
            grid=grid,
            in_specs=in_specs,
            out_specs=out_specs,
        ),
        compiler_params=pltpu.CompilerParams(
            dimension_semantics=("parallel",)),
        cost_estimate=cost,
    )(x_t, w1, b1, w2, b2, w3, b3, w4c, b4)


# -----------------------------------------------------------------------------
# Thin PyTorch-layout shim: (N, 2) -> (N, 1). For peak performance produce
# collocation points lanes-major upstream and call laplace_pinn_forward_t
# directly (avoids two extra HBM transpose passes).
# -----------------------------------------------------------------------------
def laplace_pinn_forward(x, params, **kw):
    return laplace_pinn_forward_t(x.T, params, **kw).T


# -----------------------------------------------------------------------------
# Deterministic parameter init mirroring the PyTorch __init__:
#   layers1/2/3: kaiming_normal_(mode='fan_out', nonlinearity='tanh')
#   layers4:     default nn.Linear init
# Weights kept in PyTorch (out, in) layout; biases stored as (out, 1).
# -----------------------------------------------------------------------------
def init_params(key):
    gain_tanh = 5.0 / 3.0  # torch.nn.init.calculate_gain('tanh')

    def kaiming_normal_fan_out(k, out_f, in_f):
        std = gain_tanh / jnp.sqrt(jnp.float32(out_f))   # fan_out mode
        return std * jax.random.normal(k, (out_f, in_f), dtype=jnp.float32)

    def default_linear(k, out_f, in_f):
        bound = 1.0 / jnp.sqrt(jnp.float32(in_f))
        return jax.random.uniform(k, (out_f, in_f), dtype=jnp.float32,
                                  minval=-bound, maxval=bound)

    def bias(k, out_f, in_f):
        bound = 1.0 / jnp.sqrt(jnp.float32(in_f))
        return jax.random.uniform(k, (out_f, 1), dtype=jnp.float32,
                                  minval=-bound, maxval=bound)

    ks = jax.random.split(key, 8)
    w1 = kaiming_normal_fan_out(ks[0], 30, 2);  b1 = bias(ks[1], 30, 2)
    w2 = kaiming_normal_fan_out(ks[2], 30, 30); b2 = bias(ks[3], 30, 30)
    w3 = kaiming_normal_fan_out(ks[4], 30, 30); b3 = bias(ks[5], 30, 30)
    w4 = default_linear(ks[6], 1, 30);          b4 = bias(ks[7], 1, 30)
    return (w1, b1, w2, b2, w3, b3, w4, b4)


def reference_forward(x, params):
    w1, b1, w2, b2, w3, b3, w4, b4 = params
    h = jnp.tanh(x @ w1.T + b1.T)
    h = jnp.tanh(h @ w2.T + b2.T)
    h = jnp.tanh(h @ w3.T + b3.T)
    return h @ w4.T + b4.T


if __name__ == "__main__":
    key = jax.random.PRNGKey(0)
    pkey, xkey1, xkey2 = jax.random.split(key, 3)
    params = init_params(pkey)

    # Small collocation batch (8 points in [0,1]^2), lanes-major contract.
    # Exercises the single partial block path (8 valid of a 512-lane block).
    x_small_t = jax.random.uniform(xkey1, (2, 8), dtype=jnp.float32)
    out_small = jax.block_until_ready(laplace_pinn_forward_t(x_small_t, params))
    ref_small = reference_forward(x_small_t.T, params).T
    assert out_small.shape == (1, 8)
    assert jnp.allclose(out_small, ref_small, atol=1e-4, rtol=1e-4), \
        "small-batch mismatch vs reference"

    # Non-multiple batch: N=1300 -> block_n=1024, 2 grid steps (both v7x TCs),
    # partial last block with no explicit padding.
    x_big_t = jax.random.uniform(xkey2, (2, 1300), dtype=jnp.float32)
    out_big = jax.block_until_ready(laplace_pinn_forward_t(x_big_t, params))
    ref_big = reference_forward(x_big_t.T, params).T
    assert out_big.shape == (1, 1300)
    assert jnp.allclose(out_big, ref_big, atol=1e-4, rtol=1e-4), \
        "large-batch mismatch vs reference"

    # PyTorch-layout shim (spec interface): (N, 2) -> (N, 1).
    x_pt = x_big_t.T
    out_pt = jax.block_until_ready(laplace_pinn_forward(x_pt, params))
    assert out_pt.shape == (1300, 1)
    assert jnp.allclose(out_pt, reference_forward(x_pt, params),
                        atol=1e-4, rtol=1e-4), "torch-layout shim mismatch"

    print("KERNEL_OK")
</pallas_src>

<mosaic_0001>
module attributes {stable_mosaic.version = 11 : i64} {
  func.func @_laplace_pinn_kernel(%arg0: i32, %arg1: memref<2x512xf32, #tpu.memory_space<vmem>>, %arg2: memref<30x2xf32, #tpu.memory_space<vmem>>, %arg3: memref<30x1xf32, #tpu.memory_space<vmem>>, %arg4: memref<30x30xf32, #tpu.memory_space<vmem>>, %arg5: memref<30x1xf32, #tpu.memory_space<vmem>>, %arg6: memref<30x30xf32, #tpu.memory_space<vmem>>, %arg7: memref<30x1xf32, #tpu.memory_space<vmem>>, %arg8: memref<30x1xf32, #tpu.memory_space<vmem>>, %arg9: memref<1x1xf32, #tpu.memory_space<vmem>>, %arg10: memref<1x512xf32, #tpu.memory_space<vmem>>) attributes {dimension_semantics = [#tpu.dimension_semantics<parallel>], iteration_bounds = array<i64: 1>, scalar_prefetch = 0 : i64, scratch_operands = 0 : i64, tpu.core_type = #tpu.core_type<tc>, window_params = [{transform_indices = @transform_0, window_bounds = array<i64: 2, 512>}, {pipeline_mode = #tpu.pipeline_mode<synchronous>, transform_indices = @transform_1, window_bounds = array<i64: 30, 2>}, {pipeline_mode = #tpu.pipeline_mode<synchronous>, transform_indices = @transform_2, window_bounds = array<i64: 30, 1>}, {pipeline_mode = #tpu.pipeline_mode<synchronous>, transform_indices = @transform_3, window_bounds = array<i64: 30, 30>}, {pipeline_mode = #tpu.pipeline_mode<synchronous>, transform_indices = @transform_4, window_bounds = array<i64: 30, 1>}, {pipeline_mode = #tpu.pipeline_mode<synchronous>, transform_indices = @transform_5, window_bounds = array<i64: 30, 30>}, {pipeline_mode = #tpu.pipeline_mode<synchronous>, transform_indices = @transform_6, window_bounds = array<i64: 30, 1>}, {pipeline_mode = #tpu.pipeline_mode<synchronous>, transform_indices = @transform_7, window_bounds = array<i64: 30, 1>}, {pipeline_mode = #tpu.pipeline_mode<synchronous>, transform_indices = @transform_8, window_bounds = array<i64: 1, 1>}, {transform_indices = @transform_9, window_bounds = array<i64: 1, 512>}]} {
    %c0 = arith.constant 0 : index
    %c0_0 = arith.constant 0 : index
    %0 = vector.load %arg2[%c0, %c0_0] : memref<30x2xf32, #tpu.memory_space<vmem>>, vector<30x2xf32>
    %c0_1 = arith.constant 0 : index
    %c0_2 = arith.constant 0 : index
    %1 = vector.load %arg3[%c0_1, %c0_2] : memref<30x1xf32, #tpu.memory_space<vmem>>, vector<30x1xf32>
    %c0_3 = arith.constant 0 : index
    %c0_4 = arith.constant 0 : index
    %2 = vector.load %arg4[%c0_3, %c0_4] : memref<30x30xf32, #tpu.memory_space<vmem>>, vector<30x30xf32>
    %c0_5 = arith.constant 0 : index
    %c0_6 = arith.constant 0 : index
    %3 = vector.load %arg5[%c0_5, %c0_6] : memref<30x1xf32, #tpu.memory_space<vmem>>, vector<30x1xf32>
    %c0_7 = arith.constant 0 : index
    %c0_8 = arith.constant 0 : index
    %4 = vector.load %arg6[%c0_7, %c0_8] : memref<30x30xf32, #tpu.memory_space<vmem>>, vector<30x30xf32>
    %c0_9 = arith.constant 0 : index
    %c0_10 = arith.constant 0 : index
    %5 = vector.load %arg7[%c0_9, %c0_10] : memref<30x1xf32, #tpu.memory_space<vmem>>, vector<30x1xf32>
    %c0_11 = arith.constant 0 : index
    %c0_12 = arith.constant 0 : index
    %6 = vector.load %arg8[%c0_11, %c0_12] : memref<30x1xf32, #tpu.memory_space<vmem>>, vector<30x1xf32>
    %c0_13 = arith.constant 0 : index
    %c0_14 = arith.constant 0 : index
    %7 = vector.load %arg9[%c0_13, %c0_14] : memref<1x1xf32, #tpu.memory_space<vmem>>, vector<1x1xf32>
    %c0_i32 = arith.constant 0 : i32
    %c512_i32 = arith.constant 512 : i32
    %8 = arith.muli %c0_i32, %c512_i32 : i32
    %9 = tpu.assume_multiple %8, 512 : i32
    %c0_15 = arith.constant 0 : index
    %10 = arith.index_cast %9 : i32 to index
    %11 = vector.load %arg1[%c0_15, %10] : memref<2x512xf32, #tpu.memory_space<vmem>>, vector<2x512xf32>
    %12 = vector.extract_strided_slice %0 {offsets = [0, 0], sizes = [30, 1], strides = [1, 1]} : vector<30x2xf32> to vector<30x1xf32>
    %13 = vector.extract_strided_slice %11 {offsets = [0, 0], sizes = [1, 512], strides = [1, 1]} : vector<2x512xf32> to vector<1x512xf32>
    %14 = vector.broadcast %12 : vector<30x1xf32> to vector<30x512xf32>
    %15 = vector.broadcast %13 : vector<1x512xf32> to vector<30x512xf32>
    %16 = arith.mulf %14, %15 : vector<30x512xf32>
    %17 = vector.extract_strided_slice %0 {offsets = [0, 1], sizes = [30, 1], strides = [1, 1]} : vector<30x2xf32> to vector<30x1xf32>
    %18 = vector.extract_strided_slice %11 {offsets = [1, 0], sizes = [1, 512], strides = [1, 1]} : vector<2x512xf32> to vector<1x512xf32>
    %19 = vector.broadcast %17 : vector<30x1xf32> to vector<30x512xf32>
    %20 = vector.broadcast %18 : vector<1x512xf32> to vector<30x512xf32>
    %21 = arith.mulf %19, %20 : vector<30x512xf32>
    %22 = arith.addf %16, %21 : vector<30x512xf32>
    %23 = vector.broadcast %1 : vector<30x1xf32> to vector<30x512xf32>
    %24 = arith.addf %22, %23 : vector<30x512xf32>
    %25 = math.tanh %24 : vector<30x512xf32>
    %cst = arith.constant dense<0.000000e+00> : vector<30x512xf32>
    %26 = tpu.matmul %2, %25, %cst {dimension_numbers = #tpu.dot_dimension_numbers<[1], [0], [0], [1], [0, 0, 1, 1], [], []>} : vector<30x30xf32>, vector<30x512xf32>, vector<30x512xf32> -> vector<30x512xf32>
    %27 = vector.broadcast %3 : vector<30x1xf32> to vector<30x512xf32>
    %28 = arith.addf %26, %27 : vector<30x512xf32>
    %29 = math.tanh %28 : vector<30x512xf32>
    %cst_16 = arith.constant dense<0.000000e+00> : vector<30x512xf32>
    %30 = tpu.matmul %4, %29, %cst_16 {dimension_numbers = #tpu.dot_dimension_numbers<[1], [0], [0], [1], [0, 0, 1, 1], [], []>} : vector<30x30xf32>, vector<30x512xf32>, vector<30x512xf32> -> vector<30x512xf32>
    %31 = vector.broadcast %5 : vector<30x1xf32> to vector<30x512xf32>
    %32 = arith.addf %30, %31 : vector<30x512xf32>
    %33 = math.tanh %32 : vector<30x512xf32>
    %34 = vector.broadcast %6 : vector<30x1xf32> to vector<30x512xf32>
    %35 = arith.mulf %34, %33 : vector<30x512xf32>
    %cst_17 = arith.constant dense<0.000000e+00> : vector<512xf32>
    %36 = vector.multi_reduction <add>, %35, %cst_17 [0] : vector<30x512xf32> to vector<512xf32>
    %37 = vector.shape_cast %36 : vector<512xf32> to vector<1x512xf32>
    %38 = vector.broadcast %7 : vector<1x1xf32> to vector<1x512xf32>
    %39 = arith.addf %37, %38 : vector<1x512xf32>
    %c0_18 = arith.constant 0 : index
    %40 = arith.index_cast %9 : i32 to index
    %41 = vector.load %arg10[%c0_18, %40] : memref<1x512xf32, #tpu.memory_space<vmem>>, vector<1x512xf32>
    tpu.vector_store %arg10[%c0_18, %40], %39 {strides = array<i32>} : memref<1x512xf32, #tpu.memory_space<vmem>>, vector<1x512xf32>,
    %c1_i32 = arith.constant 1 : i32
    return
  }
  func.func @transform_0(%arg0: i32) -> (i32, i32) {
    %c0_i32 = arith.constant 0 : i32
    %c0_i32_0 = arith.constant 0 : i32
    return %c0_i32, %arg0 : i32, i32
  }
  func.func @transform_1(%arg0: i32) -> (i32, i32) {
    %c0_i32 = arith.constant 0 : i32
    %c0_i32_0 = arith.constant 0 : i32
    %c0_i32_1 = arith.constant 0 : i32
    return %c0_i32, %c0_i32_0 : i32, i32
  }
  func.func @transform_2(%arg0: i32) -> (i32, i32) {
    %c0_i32 = arith.constant 0 : i32
    %c0_i32_0 = arith.constant 0 : i32
    %c0_i32_1 = arith.constant 0 : i32
    return %c0_i32, %c0_i32_0 : i32, i32
  }
  func.func @transform_3(%arg0: i32) -> (i32, i32) {
    %c0_i32 = arith.constant 0 : i32
    %c0_i32_0 = arith.constant 0 : i32
    %c0_i32_1 = arith.constant 0 : i32
    return %c0_i32, %c0_i32_0 : i32, i32
  }
  func.func @transform_4(%arg0: i32) -> (i32, i32) {
    %c0_i32 = arith.constant 0 : i32
    %c0_i32_0 = arith.constant 0 : i32
    %c0_i32_1 = arith.constant 0 : i32
    return %c0_i32, %c0_i32_0 : i32, i32
  }
  func.func @transform_5(%arg0: i32) -> (i32, i32) {
    %c0_i32 = arith.constant 0 : i32
    %c0_i32_0 = arith.constant 0 : i32
    %c0_i32_1 = arith.constant 0 : i32
    return %c0_i32, %c0_i32_0 : i32, i32
  }
  func.func @transform_6(%arg0: i32) -> (i32, i32) {
    %c0_i32 = arith.constant 0 : i32
    %c0_i32_0 = arith.constant 0 : i32
    %c0_i32_1 = arith.constant 0 : i32
    return %c0_i32, %c0_i32_0 : i32, i32
  }
  func.func @transform_7(%arg0: i32) -> (i32, i32) {
    %c0_i32 = arith.constant 0 : i32
    %c0_i32_0 = arith.constant 0 : i32
    %c0_i32_1 = arith.constant 0 : i32
    return %c0_i32, %c0_i32_0 : i32, i32
  }
  func.func @transform_8(%arg0: i32) -> (i32, i32) {
    %c0_i32 = arith.constant 0 : i32
    %c0_i32_0 = arith.constant 0 : i32
    %c0_i32_1 = arith.constant 0 : i32
    return %c0_i32, %c0_i32_0 : i32, i32
  }
  func.func @transform_9(%arg0: i32) -> (i32, i32) {
    %c0_i32 = arith.constant 0 : i32
    %c0_i32_0 = arith.constant 0 : i32
    return %c0_i32, %arg0 : i32, i32
  }
}

</mosaic_0001>

<llo_original>
// kernel: laplace_pinn_forward_t.1
$region0: #{laplace_pinn_forward_t.1}
  #allocation0 [shape = 'u32[]', space=smem, size = 0x4, offset = 0x4, fixed_abs, tag = 'smem constant byte address 0x4 - core index']
  #allocation1 [shape = 'u32[72,128]{1,0:T(1,128)}', space=vmem, size = 0x9000, scoped, tag = 'internal scratch']
  #allocation2 [shape = 'f32[1,1]{1,0:T(1,128)S(1)}', space=vmem, size = 0x200, scoped, tag = 'scoped memory for laplace_pinn_forward_t.1']
  %s0 = inlined_call_operand.vmem [shape: f32[2,8], index: 0, kind: input, shape index: {}]
  %s1 = inlined_call_operand.vmem [shape: f32[30,2], index: 1, kind: input, shape index: {}]
  %s2 = inlined_call_operand.vmem [shape: f32[30,1], index: 2, kind: input, shape index: {}]
  %s3 = inlined_call_operand.vmem [shape: f32[30,30], index: 3, kind: input, shape index: {}]
  %s4 = inlined_call_operand.vmem [shape: f32[30,1], index: 4, kind: input, shape index: {}]
  %s5 = inlined_call_operand.vmem [shape: f32[30,30], index: 5, kind: input, shape index: {}]
  %s6 = inlined_call_operand.vmem [shape: f32[30,1], index: 6, kind: input, shape index: {}]
  %s7 = inlined_call_operand.vmem [shape: f32[30,1], index: 7, kind: input, shape index: {}]
  %s8 = inlined_call_operand.<no memory space> [shape: f32[1,1], index: 8, kind: input, shape index: {}]
  %s9 = inlined_call_operand.hbm [shape: f32[1,8], index: 9, kind: output, shape index: {}]
  %s10 = sld [smem:[#allocation0]]
  $region46: #{laplace_pinn_forward_t.1} parent=0
    _
  %s12 = ssub.s32 1, %s10
  %s13 = scalar_select 0, %s12, %s10
  %v14 = vstv %s8
  %15 = vst [vmem:[#allocation2] sm:$0x1] %v14
  $region1: #{laplace_pinn_forward_t.1} parent=0
    #allocation3 [shape = 'u8[2048]{0}', space=vmem, size = 0x800, scoped, tag = 'output window, operand 0, single buffered']
    #allocation4 [shape = 's32[1]{0}', space=sflag, size = 0x4, scoped, tag = 'scoped memory for laplace_pinn_forward_t.1']
    %16 = vsyncpa [#allocation4], 0
    // Predicated region
    $region2: #{laplace_pinn_forward_t.1} parent=1 // pred_check
      _
    $region3: #{laplace_pinn_forward_t.1} parent=1 // pred_check_branch
      %18 = sbr.rel (0) target = $region5
    $region4: #{laplace_pinn_forward_t.1} parent=1 // pred_region
      _
    $region5: #{laplace_pinn_forward_t.1} parent=1 // pred_fallthru
      _
    // Predicated region
    $region6: #{laplace_pinn_forward_t.1} parent=1 // pred_check
      _
    $region7: #{laplace_pinn_forward_t.1} parent=1 // pred_check_branch
      %20 = sbr.rel (0) target = $region9
    $region8: #{laplace_pinn_forward_t.1} parent=1 // pred_region
      _
    $region9: #{laplace_pinn_forward_t.1} parent=1 // pred_fallthru
      _
    // Predicated region
    $region10: #{laplace_pinn_forward_t.1} parent=1 // pred_check
      _
    $region11: #{laplace_pinn_forward_t.1} parent=1 // pred_check_branch
      %22 = sbr.rel (0) target = $region13
    $region12: #{laplace_pinn_forward_t.1} parent=1 // pred_region
      _
    $region13: #{laplace_pinn_forward_t.1} parent=1 // pred_fallthru
      _
    // Predicated region
    $region14: #{laplace_pinn_forward_t.1} parent=1 // pred_check
      _
    $region15: #{laplace_pinn_forward_t.1} parent=1 // pred_check_branch
      %24 = sbr.rel (0) target = $region17
    $region16: #{laplace_pinn_forward_t.1} parent=1 // pred_region
      _
    $region17: #{laplace_pinn_forward_t.1} parent=1 // pred_fallthru
      _
    // Predicated region
    $region18: #{laplace_pinn_forward_t.1} parent=1 // pred_check
      _
    $region19: #{laplace_pinn_forward_t.1} parent=1 // pred_check_branch
      %26 = sbr.rel (0) target = $region21
    $region20: #{laplace_pinn_forward_t.1} parent=1 // pred_region
      _
    $region21: #{laplace_pinn_forward_t.1} parent=1 // pred_fallthru
      _
    // Predicated region
    $region22: #{laplace_pinn_forward_t.1} parent=1 // pred_check
      _
    $region23: #{laplace_pinn_forward_t.1} parent=1 // pred_check_branch
      %28 = sbr.rel (0) target = $region25
    $region24: #{laplace_pinn_forward_t.1} parent=1 // pred_region
      _
    $region25: #{laplace_pinn_forward_t.1} parent=1 // pred_fallthru
      _
    // Predicated region
    $region26: #{laplace_pinn_forward_t.1} parent=1 // pred_check
      _
    $region27: #{laplace_pinn_forward_t.1} parent=1 // pred_check_branch
      %30 = sbr.rel (0) target = $region29
    $region28: #{laplace_pinn_forward_t.1} parent=1 // pred_region
      _
    $region29: #{laplace_pinn_forward_t.1} parent=1 // pred_fallthru
      _
    // Predicated region
    $region30: #{laplace_pinn_forward_t.1} parent=1 // pred_check
      _
    $region31: #{laplace_pinn_forward_t.1} parent=1 // pred_check_branch
      %32 = sbr.rel (0) target = $region33
    $region32: #{laplace_pinn_forward_t.1} parent=1 // pred_region
      _
    $region33: #{laplace_pinn_forward_t.1} parent=1 // pred_fallthru
      _
    // Predicated region
    $region34: #{laplace_pinn_forward_t.1} parent=1 // pred_check
      _
    $region35: #{laplace_pinn_forward_t.1} parent=1 // pred_check_branch
      %34 = sbr.rel (0) target = $region37
    $region36: #{laplace_pinn_forward_t.1} parent=1 // pred_region
      _
    $region37: #{laplace_pinn_forward_t.1} parent=1 // pred_fallthru
      _
    %v35 = vld [vmem:[%s1] sm:$0xff]
    %v36 = vld [vmem:[%s1 + $0x8] sm:$0xff]
    %v37 = vld [vmem:[%s1 + $0x10] sm:$0xff]
    %v38 = vld [vmem:[%s1 + $0x18] sm:$0x3f]
    %v39 = vld [vmem:[%s2] sm:$0xff]
    %v40 = vld [vmem:[%s2 + $0x8] sm:$0xff]
    %v41 = vld [vmem:[%s2 + $0x10] sm:$0xff]
    %v42 = vld [vmem:[%s2 + $0x18] sm:$0x3f]
    %v43 = vld [vmem:[%s3] sm:$0xff]
    %v44 = vld [vmem:[%s3 + $0x8] sm:$0xff]
    %v45 = vld [vmem:[%s3 + $0x10] sm:$0xff]
    %v46 = vld [vmem:[%s3 + $0x18] sm:$0x3f]
    %v47 = vld [vmem:[%s4] sm:$0xff]
    %v48 = vld [vmem:[%s4 + $0x8] sm:$0xff]
    %v49 = vld [vmem:[%s4 + $0x10] sm:$0xff]
    %v50 = vld [vmem:[%s4 + $0x18] sm:$0x3f]
    %v51 = vld [vmem:[%s5] sm:$0xff]
    %v52 = vld [vmem:[%s5 + $0x8] sm:$0xff]
    %v53 = vld [vmem:[%s5 + $0x10] sm:$0xff]
    %v54 = vld [vmem:[%s5 + $0x18] sm:$0x3f]
    %v55 = vld [vmem:[%s6] sm:$0xff]
    %v56 = vld [vmem:[%s6 + $0x8] sm:$0xff]
    %v57 = vld [vmem:[%s6 + $0x10] sm:$0xff]
    %v58 = vld [vmem:[%s6 + $0x18] sm:$0x3f]
    %v59 = vld [vmem:[%s7] sm:$0xff]
    %v60 = vld [vmem:[%s7 + $0x8] sm:$0xff]
    %v61 = vld [vmem:[%s7 + $0x10] sm:$0xff]
    %v62 = vld [vmem:[%s7 + $0x18] sm:$0x3f]
    %v63 = vld [vmem:[#allocation2] sm:$0x1]
    %v64 = vld [vmem:[%s0] sm:$0xff]
    %66 = vset.pattern.permute.xlu0 0
    %67 = vperm.xlu0 %66, %v35
    %v68 = vpop.permute.xlu0 %67
    %71 = vset.pattern.permute.xlu0 0
    %72 = vperm.xlu0 %71, %v36
    %v73 = vpop.permute.xlu0 %72
    %76 = vset.pattern.permute.xlu0 0
    %77 = vperm.xlu0 %76, %v37
    %v78 = vpop.permute.xlu0 %77
    %81 = vset.pattern.permute.xlu0 0
    %82 = vperm.xlu0 %81, %v38
    %v83 = vpop.permute.xlu0 %82
    %v86 = vperm.slane %v64, 0
    %v87 = vperm.slane %v64, 2
    %v88 = vperm.slane %v64, 4
    %v89 = vperm.slane %v64, 6
    %v94 = vperm.slane %v86, 0
    %v95 = vperm.slane %v87, 0
    %v96 = vperm.slane %v88, 0
    %v97 = vperm.slane %v89, 0
    %v98 = vmul.f32 %v68, %v94
    %v99 = vmul.f32 %v68, %v95
    %v100 = vmul.f32 %v68, %v96
    %v101 = vmul.f32 %v68, %v97
    %v102 = vmul.f32 %v73, %v94
    %v103 = vmul.f32 %v73, %v95
    %v104 = vmul.f32 %v73, %v96
    %v105 = vmul.f32 %v73, %v97
    %v106 = vmul.f32 %v78, %v94
    %v107 = vmul.f32 %v78, %v95
    %v108 = vmul.f32 %v78, %v96
    %v109 = vmul.f32 %v78, %v97
    %v110 = vmul.f32 %v83, %v94
    %v111 = vmul.f32 %v83, %v95
    %v112 = vmul.f32 %v83, %v96
    %v113 = vmul.f32 %v83, %v97
    %114 = vset.pattern.permute.xlu0 1
    %115 = vperm.xlu0 %114, %v35
    %v116 = vpop.permute.xlu0 %115
    %118 = vset.pattern.permute.xlu0 1
    %119 = vperm.xlu0 %118, %v36
    %v120 = vpop.permute.xlu0 %119
    %122 = vset.pattern.permute.xlu0 1
    %123 = vperm.xlu0 %122, %v37
    %v124 = vpop.permute.xlu0 %123
    %126 = vset.pattern.permute.xlu0 1
    %127 = vperm.xlu0 %126, %v38
    %v128 = vpop.permute.xlu0 %127
    %v130 = vperm.slane %v64, 1
    %v131 = vperm.slane %v64, 3
    %v132 = vperm.slane %v64, 5
    %v133 = vperm.slane %v64, 7
    %v138 = vperm.slane %v130, 1
    %v139 = vperm.slane %v131, 1
    %v140 = vperm.slane %v132, 1
    %v141 = vperm.slane %v133, 1
    %v142 = vmul.f32 %v116, %v138
    %v143 = vmul.f32 %v116, %v139
    %v144 = vmul.f32 %v116, %v140
    %v145 = vmul.f32 %v116, %v141
    %v146 = vmul.f32 %v120, %v138
    %v147 = vmul.f32 %v120, %v139
    %v148 = vmul.f32 %v120, %v140
    %v149 = vmul.f32 %v120, %v141
    %v150 = vmul.f32 %v124, %v138
    %v151 = vmul.f32 %v124, %v139
    %v152 = vmul.f32 %v124, %v140
    %v153 = vmul.f32 %v124, %v141
    %v154 = vmul.f32 %v128, %v138
    %v155 = vmul.f32 %v128, %v139
    %v156 = vmul.f32 %v128, %v140
    %v157 = vmul.f32 %v128, %v141
    %v158 = vadd.f32 %v98, %v142
    %v159 = vadd.f32 %v99, %v143
    %v160 = vadd.f32 %v100, %v144
    %v161 = vadd.f32 %v101, %v145
    %v162 = vadd.f32 %v102, %v146
    %v163 = vadd.f32 %v103, %v147
    %v164 = vadd.f32 %v104, %v148
    %v165 = vadd.f32 %v105, %v149
    %v166 = vadd.f32 %v106, %v150
    %v167 = vadd.f32 %v107, %v151
    %v168 = vadd.f32 %v108, %v152
    %v169 = vadd.f32 %v109, %v153
    %v170 = vadd.f32 %v110, %v154
    %v171 = vadd.f32 %v111, %v155
    %v172 = vadd.f32 %v112, %v156
    %v173 = vadd.f32 %v113, %v157
    %175 = vset.pattern.permute.xlu0 0
    %176 = vperm.xlu0 %175, %v39
    %v177 = vpop.permute.xlu0 %176
    %180 = vset.pattern.permute.xlu0 0
    %181 = vperm.xlu0 %180, %v40
    %v182 = vpop.permute.xlu0 %181
    %185 = vset.pattern.permute.xlu0 0
    %186 = vperm.xlu0 %185, %v41
    %v187 = vpop.permute.xlu0 %186
    %190 = vset.pattern.permute.xlu0 0
    %191 = vperm.xlu0 %190, %v42
    %v192 = vpop.permute.xlu0 %191
    %v194 = vadd.f32 %v158, %v177
    %v195 = vadd.f32 %v159, %v177
    %v196 = vadd.f32 %v160, %v177
    %v197 = vadd.f32 %v161, %v177
    %v198 = vadd.f32 %v162, %v182
    %v199 = vadd.f32 %v163, %v182
    %v200 = vadd.f32 %v164, %v182
    %v201 = vadd.f32 %v165, %v182
    %v202 = vadd.f32 %v166, %v187
    %v203 = vadd.f32 %v167, %v187
    %v204 = vadd.f32 %v168, %v187
    %v205 = vadd.f32 %v169, %v187
    %v206 = vadd.f32 %v170, %v192
    %v207 = vadd.f32 %v171, %v192
    %v208 = vadd.f32 %v172, %v192
    %v209 = vadd.f32 %v173, %v192
    %v210 = vtanh.pop %v194
    %v211 = vtanh.pop %v195
    %v212 = vtanh.pop %v196
    %v213 = vtanh.pop %v197
    %v214 = vtanh.pop %v198
    %v215 = vtanh.pop %v199
    %v216 = vtanh.pop %v200
    %v217 = vtanh.pop %v201
    %v218 = vtanh.pop %v202
    %v219 = vtanh.pop %v203
    %v220 = vtanh.pop %v204
    %v221 = vtanh.pop %v205
    %v222 = vtanh.pop %v206
    %v223 = vtanh.pop %v207
    %v224 = vtanh.pop %v208
    %v225 = vtanh.pop %v209
    %227 = vset.pattern.permute.xlu0 0
    %228 = vperm.xlu0 %227, %v47
    %v229 = vpop.permute.xlu0 %228
    %232 = vset.pattern.permute.xlu0 0
    %233 = vperm.xlu0 %232, %v48
    %v234 = vpop.permute.xlu0 %233
    %237 = vset.pattern.permute.xlu0 0
    %238 = vperm.xlu0 %237, %v49
    %v239 = vpop.permute.xlu0 %238
    %242 = vset.pattern.permute.xlu0 0
    %243 = vperm.xlu0 %242, %v50
    %v244 = vpop.permute.xlu0 %243
    %vm246 = vcmask 244736
    %v248 = vsel %vm246, %v43, 0
    %v251 = vsel %vm246, %v44, 0
    %v254 = vsel %vm246, %v45, 0
    %v257 = vsel %vm246, %v46, 0
    %vm259 = vcmask 1045504
    %v261 = vsel %vm259, %v222, 0
    %v264 = vsel %vm259, %v223, 0
    %v267 = vsel %vm259, %v224, 0
    %v270 = vsel %vm259, %v225, 0
    %272 = vmatpush.msra.mxu0 0.0
    %273 = vmatpush.msra.mxu0 0.0
    %274 = vmatpush.msra.mxu0 0.0
    %275 = vmatpush.msra.mxu0 0.0
    %276 = vmatpush.msra.mxu0 0.0
    %277 = vmatpush.msra.mxu0 0.0
    %278 = vmatpush.msra.mxu0 0.0
    %279 = vmatpush.msra.mxu0 0.0
    %280 = vmatpush.msra.mxu0 0.0
    %281 = vmatpush.msra.mxu0 0.0
    %282 = vmatpush.msra.mxu0 0.0
    %283 = vmatpush.msra.mxu0 0.0
    %284 = vmatpush.msra.mxu0 %v261
    %285 = vmatpush.msra.mxu0 %v218
    %286 = vmatpush.msra.mxu0 %v214
    %287 = vmatpush.msra.mxu0 %v210
    %288 = vmatmul.f32.gmra.mxu0 %v248
    %v289 = vpop.f32.mrf.mxu0
    %v290 = vadd.f32 %v229, %v289
    %291 = vmatmul.f32.gmra.mxu0 %v251
    %v292 = vpop.f32.mrf.mxu0
    %v293 = vadd.f32 %v234, %v292
    %294 = vmatmul.f32.gmra.mxu0 %v254
    %v295 = vpop.f32.mrf.mxu0
    %v296 = vadd.f32 %v239, %v295
    %297 = vmatmul.f32.gmra.mxu0 %v257
    %v298 = vpop.f32.mrf.mxu0
    %v299 = vadd.f32 %v244, %v298
    %300 = vdwg.mxu0
    %301 = vmatpush.msra.mxu0 0.0
    %302 = vmatpush.msra.mxu0 0.0
    %303 = vmatpush.msra.mxu0 0.0
    %304 = vmatpush.msra.mxu0 0.0
    %305 = vmatpush.msra.mxu0 0.0
    %306 = vmatpush.msra.mxu0 0.0
    %307 = vmatpush.msra.mxu0 0.0
    %308 = vmatpush.msra.mxu0 0.0
    %309 = vmatpush.msra.mxu0 0.0
    %310 = vmatpush.msra.mxu0 0.0
    %311 = vmatpush.msra.mxu0 0.0
    %312 = vmatpush.msra.mxu0 0.0
    %313 = vmatpush.msra.mxu0 %v264
    %314 = vmatpush.msra.mxu0 %v219
    %315 = vmatpush.msra.mxu0 %v215
    %316 = vmatpush.msra.mxu0 %v211
    %317 = vmatmul.f32.gmra.mxu0 %v248
    %v318 = vpop.f32.mrf.mxu0
    %v319 = vadd.f32 %v229, %v318
    %320 = vmatmul.f32.gmra.mxu0 %v251
    %v321 = vpop.f32.mrf.mxu0
    %v322 = vadd.f32 %v234, %v321
    %323 = vmatmul.f32.gmra.mxu0 %v254
    %v324 = vpop.f32.mrf.mxu0
    %v325 = vadd.f32 %v239, %v324
    %326 = vmatmul.f32.gmra.mxu0 %v257
    %v327 = vpop.f32.mrf.mxu0
    %v328 = vadd.f32 %v244, %v327
    %329 = vdwg.mxu0
    %330 = vmatpush.msra.mxu0 0.0
    %331 = vmatpush.msra.mxu0 0.0
    %332 = vmatpush.msra.mxu0 0.0
    %333 = vmatpush.msra.mxu0 0.0
    %334 = vmatpush.msra.mxu0 0.0
    %335 = vmatpush.msra.mxu0 0.0
    %336 = vmatpush.msra.mxu0 0.0
    %337 = vmatpush.msra.mxu0 0.0
    %338 = vmatpush.msra.mxu0 0.0
    %339 = vmatpush.msra.mxu0 0.0
    %340 = vmatpush.msra.mxu0 0.0
    %341 = vmatpush.msra.mxu0 0.0
    %342 = vmatpush.msra.mxu0 %v267
    %343 = vmatpush.msra.mxu0 %v220
    %344 = vmatpush.msra.mxu0 %v216
    %345 = vmatpush.msra.mxu0 %v212
    %346 = vmatmul.f32.gmra.mxu0 %v248
    %v347 = vpop.f32.mrf.mxu0
    %v348 = vadd.f32 %v229, %v347
    %349 = vmatmul.f32.gmra.mxu0 %v251
    %v350 = vpop.f32.mrf.mxu0
    %v351 = vadd.f32 %v234, %v350
    %352 = vmatmul.f32.gmra.mxu0 %v254
    %v353 = vpop.f32.mrf.mxu0
    %v354 = vadd.f32 %v239, %v353
    %355 = vmatmul.f32.gmra.mxu0 %v257
    %v356 = vpop.f32.mrf.mxu0
    %v357 = vadd.f32 %v244, %v356
    %358 = vdwg.mxu0
    %359 = vmatpush.msra.mxu0 0.0
    %360 = vmatpush.msra.mxu0 0.0
    %361 = vmatpush.msra.mxu0 0.0
    %362 = vmatpush.msra.mxu0 0.0
    %363 = vmatpush.msra.mxu0 0.0
    %364 = vmatpush.msra.mxu0 0.0
    %365 = vmatpush.msra.mxu0 0.0
    %366 = vmatpush.msra.mxu0 0.0
    %367 = vmatpush.msra.mxu0 0.0
    %368 = vmatpush.msra.mxu0 0.0
    %369 = vmatpush.msra.mxu0 0.0
    %370 = vmatpush.msra.mxu0 0.0
    %371 = vmatpush.msra.mxu0 %v270
    %372 = vmatpush.msra.mxu0 %v221
    %373 = vmatpush.msra.mxu0 %v217
    %374 = vmatpush.msra.mxu0 %v213
    %375 = vmatmul.f32.gmra.mxu0 %v248
    %v376 = vpop.f32.mrf.mxu0
    %v377 = vadd.f32 %v229, %v376
    %378 = vmatmul.f32.gmra.mxu0 %v251
    %v379 = vpop.f32.mrf.mxu0
    %v380 = vadd.f32 %v234, %v379
    %381 = vmatmul.f32.gmra.mxu0 %v254
    %v382 = vpop.f32.mrf.mxu0
    %v383 = vadd.f32 %v239, %v382
    %384 = vmatmul.f32.gmra.mxu0 %v257
    %v385 = vpop.f32.mrf.mxu0
    %v386 = vadd.f32 %v244, %v385
    %387 = vdwg.mxu0
    %v388 = vtanh.pop %v290
    %v389 = vtanh.pop %v319
    %v390 = vtanh.pop %v348
    %v391 = vtanh.pop %v377
    %v392 = vtanh.pop %v293
    %v393 = vtanh.pop %v322
    %v394 = vtanh.pop %v351
    %v395 = vtanh.pop %v380
    %v396 = vtanh.pop %v296
    %v397 = vtanh.pop %v325
    %v398 = vtanh.pop %v354
    %v399 = vtanh.pop %v383
    %v400 = vtanh.pop %v299
    %v401 = vtanh.pop %v328
    %v402 = vtanh.pop %v357
    %v403 = vtanh.pop %v386
    %405 = vset.pattern.permute.xlu0 0
    %406 = vperm.xlu0 %405, %v55
    %v407 = vpop.permute.xlu0 %406
    %410 = vset.pattern.permute.xlu0 0
    %411 = vperm.xlu0 %410, %v56
    %v412 = vpop.permute.xlu0 %411
    %415 = vset.pattern.permute.xlu0 0
    %416 = vperm.xlu0 %415, %v57
    %v417 = vpop.permute.xlu0 %416
    %420 = vset.pattern.permute.xlu0 0
    %421 = vperm.xlu0 %420, %v58
    %v422 = vpop.permute.xlu0 %421
    %v425 = vsel %vm246, %v51, 0
    %v428 = vsel %vm246, %v52, 0
    %v431 = vsel %vm246, %v53, 0
    %v434 = vsel %vm246, %v54, 0
    %v437 = vsel %vm259, %v400, 0
    %v440 = vsel %vm259, %v401, 0
    %v443 = vsel %vm259, %v402, 0
    %v446 = vsel %vm259, %v403, 0
    %448 = vmatpush.msra.mxu0 0.0
    %449 = vmatpush.msra.mxu0 0.0
    %450 = vmatpush.msra.mxu0 0.0
    %451 = vmatpush.msra.mxu0 0.0
    %452 = vmatpush.msra.mxu0 0.0
    %453 = vmatpush.msra.mxu0 0.0
    %454 = vmatpush.msra.mxu0 0.0
    %455 = vmatpush.msra.mxu0 0.0
    %456 = vmatpush.msra.mxu0 0.0
    %457 = vmatpush.msra.mxu0 0.0
    %458 = vmatpush.msra.mxu0 0.0
    %459 = vmatpush.msra.mxu0 0.0
    %460 = vmatpush.msra.mxu0 %v437
    %461 = vmatpush.msra.mxu0 %v396
    %462 = vmatpush.msra.mxu0 %v392
    %463 = vmatpush.msra.mxu0 %v388
    %464 = vmatmul.f32.gmra.mxu0 %v425
    %v465 = vpop.f32.mrf.mxu0
    %v466 = vadd.f32 %v407, %v465
    %467 = vmatmul.f32.gmra.mxu0 %v428
    %v468 = vpop.f32.mrf.mxu0
    %v469 = vadd.f32 %v412, %v468
    %470 = vmatmul.f32.gmra.mxu0 %v431
    %v471 = vpop.f32.mrf.mxu0
    %v472 = vadd.f32 %v417, %v471
    %473 = vmatmul.f32.gmra.mxu0 %v434
    %v474 = vpop.f32.mrf.mxu0
    %v475 = vadd.f32 %v422, %v474
    %476 = vdwg.mxu0
    %477 = vmatpush.msra.mxu0 0.0
    %478 = vmatpush.msra.mxu0 0.0
    %479 = vmatpush.msra.mxu0 0.0
    %480 = vmatpush.msra.mxu0 0.0
    %481 = vmatpush.msra.mxu0 0.0
    %482 = vmatpush.msra.mxu0 0.0
    %483 = vmatpush.msra.mxu0 0.0
    %484 = vmatpush.msra.mxu0 0.0
    %485 = vmatpush.msra.mxu0 0.0
    %486 = vmatpush.msra.mxu0 0.0
    %487 = vmatpush.msra.mxu0 0.0
    %488 = vmatpush.msra.mxu0 0.0
    %489 = vmatpush.msra.mxu0 %v440
    %490 = vmatpush.msra.mxu0 %v397
    %491 = vmatpush.msra.mxu0 %v393
    %492 = vmatpush.msra.mxu0 %v389
    %493 = vmatmul.f32.gmra.mxu0 %v425
    %v494 = vpop.f32.mrf.mxu0
    %v495 = vadd.f32 %v407, %v494
    %496 = vmatmul.f32.gmra.mxu0 %v428
    %v497 = vpop.f32.mrf.mxu0
    %v498 = vadd.f32 %v412, %v497
    %499 = vmatmul.f32.gmra.mxu0 %v431
    %v500 = vpop.f32.mrf.mxu0
    %v501 = vadd.f32 %v417, %v500
    %502 = vmatmul.f32.gmra.mxu0 %v434
    %v503 = vpop.f32.mrf.mxu0
    %v504 = vadd.f32 %v422, %v503
    %505 = vdwg.mxu0
    %506 = vmatpush.msra.mxu0 0.0
    %507 = vmatpush.msra.mxu0 0.0
    %508 = vmatpush.msra.mxu0 0.0
    %509 = vmatpush.msra.mxu0 0.0
    %510 = vmatpush.msra.mxu0 0.0
    %511 = vmatpush.msra.mxu0 0.0
    %512 = vmatpush.msra.mxu0 0.0
    %513 = vmatpush.msra.mxu0 0.0
    %514 = vmatpush.msra.mxu0 0.0
    %515 = vmatpush.msra.mxu0 0.0
    %516 = vmatpush.msra.mxu0 0.0
    %517 = vmatpush.msra.mxu0 0.0
    %518 = vmatpush.msra.mxu0 %v443
    %519 = vmatpush.msra.mxu0 %v398
    %520 = vmatpush.msra.mxu0 %v394
    %521 = vmatpush.msra.mxu0 %v390
    %522 = vmatmul.f32.gmra.mxu0 %v425
    %v523 = vpop.f32.mrf.mxu0
    %v524 = vadd.f32 %v407, %v523
    %525 = vmatmul.f32.gmra.mxu0 %v428
    %v526 = vpop.f32.mrf.mxu0
    %v527 = vadd.f32 %v412, %v526
    %528 = vmatmul.f32.gmra.mxu0 %v431
    %v529 = vpop.f32.mrf.mxu0
    %v530 = vadd.f32 %v417, %v529
    %531 = vmatmul.f32.gmra.mxu0 %v434
    %v532 = vpop.f32.mrf.mxu0
    %v533 = vadd.f32 %v422, %v532
    %534 = vdwg.mxu0
    %535 = vmatpush.msra.mxu0 0.0
    %536 = vmatpush.msra.mxu0 0.0
    %537 = vmatpush.msra.mxu0 0.0
    %538 = vmatpush.msra.mxu0 0.0
    %539 = vmatpush.msra.mxu0 0.0
    %540 = vmatpush.msra.mxu0 0.0
    %541 = vmatpush.msra.mxu0 0.0
    %542 = vmatpush.msra.mxu0 0.0
    %543 = vmatpush.msra.mxu0 0.0
    %544 = vmatpush.msra.mxu0 0.0
    %545 = vmatpush.msra.mxu0 0.0
    %546 = vmatpush.msra.mxu0 0.0
    %547 = vmatpush.msra.mxu0 %v446
    %548 = vmatpush.msra.mxu0 %v399
    %549 = vmatpush.msra.mxu0 %v395
    %550 = vmatpush.msra.mxu0 %v391
    %551 = vmatmul.f32.gmra.mxu0 %v425
    %v552 = vpop.f32.mrf.mxu0
    %v553 = vadd.f32 %v407, %v552
    %554 = vmatmul.f32.gmra.mxu0 %v428
    %v555 = vpop.f32.mrf.mxu0
    %v556 = vadd.f32 %v412, %v555
    %557 = vmatmul.f32.gmra.mxu0 %v431
    %v558 = vpop.f32.mrf.mxu0
    %v559 = vadd.f32 %v417, %v558
    %560 = vmatmul.f32.gmra.mxu0 %v434
    %v561 = vpop.f32.mrf.mxu0
    %v562 = vadd.f32 %v422, %v561
    %563 = vdwg.mxu0
    %v564 = vtanh.pop %v466
    %v565 = vtanh.pop %v495
    %v566 = vtanh.pop %v524
    %v567 = vtanh.pop %v553
    %v568 = vtanh.pop %v469
    %v569 = vtanh.pop %v498
    %v570 = vtanh.pop %v527
    %v571 = vtanh.pop %v556
    %v572 = vtanh.pop %v472
    %v573 = vtanh.pop %v501
    %v574 = vtanh.pop %v530
    %v575 = vtanh.pop %v559
    %v576 = vtanh.pop %v475
    %v577 = vtanh.pop %v504
    %v578 = vtanh.pop %v533
    %v579 = vtanh.pop %v562
    %581 = vset.pattern.permute.xlu0 0
    %582 = vperm.xlu0 %581, %v59
    %v583 = vpop.permute.xlu0 %582
    %586 = vset.pattern.permute.xlu0 0
    %587 = vperm.xlu0 %586, %v60
    %v588 = vpop.permute.xlu0 %587
    %591 = vset.pattern.permute.xlu0 0
    %592 = vperm.xlu0 %591, %v61
    %v593 = vpop.permute.xlu0 %592
    %596 = vset.pattern.permute.xlu0 0
    %597 = vperm.xlu0 %596, %v62
    %v598 = vpop.permute.xlu0 %597
    %v600 = vmul.f32 %v583, %v564
    %v601 = vmul.f32 %v583, %v565
    %v602 = vmul.f32 %v583, %v566
    %v603 = vmul.f32 %v583, %v567
    %v604 = vmul.f32 %v588, %v568
    %v605 = vmul.f32 %v588, %v569
    %v606 = vmul.f32 %v588, %v570
    %v607 = vmul.f32 %v588, %v571
    %v608 = vmul.f32 %v593, %v572
    %v609 = vmul.f32 %v593, %v573
    %v610 = vmul.f32 %v593, %v574
    %v611 = vmul.f32 %v593, %v575
    %v612 = vmul.f32 %v598, %v576
    %v613 = vmul.f32 %v598, %v577
    %v614 = vmul.f32 %v598, %v578
    %v615 = vmul.f32 %v598, %v579
    %v616 = vadd.f32 %v600, %v604
    %v617 = vadd.f32 %v616, %v608
    %v618 = vsel %vm259, %v612, 0.0
    %v619 = vadd.f32 %v617, %v618
    %v620 = vrot.slane %v619, 4
    %v621 = vadd.f32 %v619, %v620
    %v622 = vrot.slane %v621, 2
    %v623 = vadd.f32 %v621, %v622
    %v624 = vrot.slane %v623, 1
    %v625 = vadd.f32 %v623, %v624
    %v626 = vadd.f32 %v601, %v605
    %v627 = vadd.f32 %v626, %v609
    %v628 = vsel %vm259, %v613, 0.0
    %v629 = vadd.f32 %v627, %v628
    %v630 = vrot.slane %v629, 4
    %v631 = vadd.f32 %v629, %v630
    %v632 = vrot.slane %v631, 2
    %v633 = vadd.f32 %v631, %v632
    %v634 = vrot.slane %v633, 1
    %v635 = vadd.f32 %v633, %v634
    %v636 = vadd.f32 %v602, %v606
    %v637 = vadd.f32 %v636, %v610
    %v638 = vsel %vm259, %v614, 0.0
    %v639 = vadd.f32 %v637, %v638
    %v640 = vrot.slane %v639, 4
    %v641 = vadd.f32 %v639, %v640
    %v642 = vrot.slane %v641, 2
    %v643 = vadd.f32 %v641, %v642
    %v644 = vrot.slane %v643, 1
    %v645 = vadd.f32 %v643, %v644
    %v646 = vadd.f32 %v603, %v607
    %v647 = vadd.f32 %v646, %v611
    %v648 = vsel %vm259, %v615, 0.0
    %v649 = vadd.f32 %v647, %v648
    %v650 = vrot.slane %v649, 4
    %v651 = vadd.f32 %v649, %v650
    %v652 = vrot.slane %v651, 2
    %v653 = vadd.f32 %v651, %v652
    %v654 = vrot.slane %v653, 1
    %v655 = vadd.f32 %v653, %v654
    %657 = vset.pattern.permute.xlu0 0
    %658 = vperm.xlu0 %657, %v63
    %v659 = vpop.permute.xlu0 %658
    %v661 = vperm.slane %v659, 0
    %v662 = vadd.f32 %v625, %v661
    %v663 = vadd.f32 %v635, %v661
    %v664 = vadd.f32 %v645, %v661
    %v665 = vadd.f32 %v655, %v661
    %v670 = vrot.slane %v663, 7
    %v671 = vrot.slane %v664, 6
    %v672 = vrot.slane %v665, 5
    %vm673 = vcmask 1040384
    %v674 = vsel %vm673, %v662, %v670
    %vm675 = vcmask 1042434
    %v676 = vsel %vm675, %v671, %v672
    %vm677 = vcmask 1041408
    %v678 = vsel %vm677, %v674, %v676
    %v680 = vlaneseq
    %vm681 = vcmp.ge.s32.totalorder %v680, 0
    %vm682 = vcmp.lt.s32.totalorder %v680, 512
    %vm683 = vmand %vm681, %vm682
    %684 = vst.msk [vmem:[#allocation3] sm:$0xf] %vm683, %v678
    // Predicated region
    $region38: #{laplace_pinn_forward_t.1} parent=1 // pred_check
      _
    $region39: #{laplace_pinn_forward_t.1} parent=1 // pred_check_branch
      %686 = sbr.rel (0) target = $region41
    $region40: #{laplace_pinn_forward_t.1} parent=1 // pred_region
      %688 = vsyncadd [#allocation4], 48
      %s690 = sshll.u32 [#allocation3], 4
      %s691 = int_to_ptr.vmem [resolvable:$true] %s690
      %s692 = sshll.u32 %s9, 4
      %s693 = int_to_ptr.hbm [resolvable:$true] %s692
      %695 = dma.vmem_to_hbm [thread:$0]  %s691, 16, %s693, [#allocation4]
    $region41: #{laplace_pinn_forward_t.1} parent=1 // pred_fallthru
      _
    // Predicated region
    $region42: #{laplace_pinn_forward_t.1} parent=1 // pred_check
      _
    $region43: #{laplace_pinn_forward_t.1} parent=1 // pred_check_branch
      %697 = sbr.rel (0) target = $region45
    $region44: #{laplace_pinn_forward_t.1} parent=1 // pred_region
      %699 = dma.done [#allocation4], 64
    $region45: #{laplace_pinn_forward_t.1} parent=1 // pred_fallthru
      _
    %700 = vsyncpa [#allocation4], 1

</llo_original>
